<compile_context>
chip_gen: v6e
topology: v6e:2x2x1
jax: 0.10.0
libtpu: 0.0.40
codegen_flags: <defaults>
</compile_context>

<pallas_src>
import jax
import jax.numpy as jnp
import numpy as np
from jax.experimental import pallas as pl
from jax.experimental.pallas import tpu as pltpu


def _encoder_block_kernel(x_ref, wb1_ref, wb2_ref, wsk_ref,
                          b1_ref, b2_ref, s3_ref, b3_ref, mask_ref,
                          o_ref):
    """Fused EncoderBlock over all stacked images in one step.

    x_ref:   (M, W*Cin)  stacked row-padded images (M = N*Hrp)
    wb*_ref: (3, K, W*Cout) banded 3x3 weights (dx shift + horizontal zero pad
             baked in, BN scale folded into output channels)
    wsk_ref: (W*Cin, W*Cout) block-diagonal 1x1 skip conv
    mask:    (M, 1)  1.0 on data rows, 0.0 on per-image pad rows
    """
    f32 = jnp.float32
    M = x_ref.shape[0]

    x = x_ref[...]                 # (M, W*Cin)
    mask = mask_ref[...]           # (M, 1)

    def conv3(inp, w_ref):
        # One MXU matmul per row tap over all stacked rows; the dy-1 row shift
        # is a sublane rotate of the result (result[r] needs tap dy taken from
        # input row r+dy-1).  Per-image zero pad rows (and the circular wrap
        # landing on the last image's pad rows) supply the vertical padding.
        t0 = jnp.dot(inp, w_ref[0], preferred_element_type=f32)
        t1 = jnp.dot(inp, w_ref[1], preferred_element_type=f32)
        t2 = jnp.dot(inp, w_ref[2], preferred_element_type=f32)
        return (pltpu.roll(t0, shift=1, axis=0)        # row r <- t0[r-1]
                + t1
                + pltpu.roll(t2, shift=M - 1, axis=0)) # row r <- t2[r+1]

    # conv1 -> bn1 (scale folded into weights) -> relu; zero the pad rows so
    # they act as conv2's vertical zero padding.
    h1 = jnp.maximum(conv3(x, wb1_ref) + b1_ref[...], 0.0) * mask

    # conv2 -> bn2 -> relu
    h2 = jnp.maximum(conv3(h1, wb2_ref) + b2_ref[...], 0.0)

    # 1x1 skip on x, residual add, bn3 affine (no relu)
    skip = jnp.dot(x, wsk_ref[...], preferred_element_type=f32)
    o_ref[...] = ((skip + h2) * s3_ref[...] + b3_ref[...]).astype(o_ref.dtype)


def _rows_per_image(H):
    # >= 1 zero row below the data rows (acts as vertical halo for both the
    # image itself and the next image), rounded up to a multiple of 8 so every
    # image starts on a sublane-tile boundary and extraction stays aligned.
    return ((H + 1 + 7) // 8) * 8


def prepare_encoder_block_params(params, H, W):
    """One-time (per parameter set) preprocessing, hoisted out of the call path:
    BN -> per-channel affine, 3x3 weights -> banded (K, W*Cout) matrices with the
    dx shift and horizontal zero padding baked in, 1x1 conv -> block-diagonal."""
    del H  # banding only depends on W
    w1, w2, w3, bn1, bn2, bn3 = params
    Cin, Cout = w1.shape[2], w1.shape[3]

    def fold_bn(g, b, m, v, eps=1e-5):
        s = g / jnp.sqrt(v + eps)
        return s, b - m * s

    s1, t1 = fold_bn(*bn1)
    s2, t2 = fold_bn(*bn2)
    s3, t3 = fold_bn(*bn3)

    # Column-band placement: P[dx, u, j] = 1 iff input column u feeds output
    # column j at horizontal tap dx (u = j + dx - 1, in range).
    P = np.zeros((3, W, W), np.float32)
    for dx in range(3):
        for j in range(W):
            u = j + dx - 1
            if 0 <= u < W:
                P[dx, u, j] = 1.0
    P = jnp.asarray(P)

    def band(w_hwio, scale):
        # (3, 3, ci, co) HWIO weights (BN scale folded into co) -> (3, W*ci, W*co)
        ws = (w_hwio * scale).astype(jnp.float32)
        ci, co = ws.shape[2], ws.shape[3]
        wb = jnp.einsum('xuj,yxio->yuijo', P, ws)        # (3, W, ci, W, co)
        return wb.reshape(3, W * ci, W * co)

    wb1 = band(w1, s1)                                   # (3, W*Cin,  W*Cout)
    wb2 = band(w2, s2)                                   # (3, W*Cout, W*Cout)
    wsk = jnp.einsum('uj,io->uijo', jnp.eye(W, dtype=jnp.float32),
                     w3.reshape(Cin, Cout).astype(jnp.float32)
                     ).reshape(W * Cin, W * Cout)        # block-diag 1x1 conv

    WC = W * Cout
    return dict(
        wb1=wb1, wb2=wb2, wsk=wsk,
        b1=jnp.tile(t1.astype(jnp.float32), W).reshape(1, WC),
        b2=jnp.tile(t2.astype(jnp.float32), W).reshape(1, WC),
        s3=jnp.tile(s3.astype(jnp.float32), W).reshape(1, WC),
        b3=jnp.tile(t3.astype(jnp.float32), W).reshape(1, WC),
    )


@jax.jit
def encoder_block_pallas(x_nchw, prep):
    N, Cin, H, W = x_nchw.shape
    WCin = W * Cin
    WC = prep['b1'].shape[1]
    Cout = WC // W
    Hrp = _rows_per_image(H)
    M = N * Hrp

    # glue: NCHW -> NHWC rows (H, W*Cin), pad each image to Hrp rows, stack all
    # images along the sublane/M axis.
    # TODO(synk): if the producer/consumer can use NHWC, this transpose and the
    #             final one below disappear entirely.
    x_rows = jnp.transpose(x_nchw, (0, 2, 3, 1)).reshape(N, H, WCin)
    x_stack = jnp.pad(x_rows, ((0, 0), (0, Hrp - H), (0, 0))).reshape(M, WCin)

    # data-row mask: compile-time constant under jit
    mask_np = np.zeros((Hrp, 1), np.float32)
    mask_np[:H] = 1.0
    mask = jnp.asarray(np.tile(mask_np, (N, 1)))

    out = pl.pallas_call(
        _encoder_block_kernel,
        out_shape=jax.ShapeDtypeStruct((M, WC), jnp.float32),
        grid=(1,),
        in_specs=[
            pl.BlockSpec((M, WCin), lambda i: (0, 0)),         # stacked images
            pl.BlockSpec((3, WCin, WC), lambda i: (0, 0, 0)),  # banded w1*s1
            pl.BlockSpec((3, WC, WC), lambda i: (0, 0, 0)),    # banded w2*s2
            pl.BlockSpec((WCin, WC), lambda i: (0, 0)),        # block-diag w3
            pl.BlockSpec((1, WC), lambda i: (0, 0)),           # b1
            pl.BlockSpec((1, WC), lambda i: (0, 0)),           # b2
            pl.BlockSpec((1, WC), lambda i: (0, 0)),           # s3
            pl.BlockSpec((1, WC), lambda i: (0, 0)),           # b3
            pl.BlockSpec((M, 1), lambda i: (0, 0)),            # data-row mask
        ],
        out_specs=pl.BlockSpec((M, WC), lambda i: (0, 0)),     # lane-dense, aligned
        compiler_params=pltpu.CompilerParams(
            dimension_semantics=("arbitrary",)),
    )(x_stack, prep['wb1'], prep['wb2'], prep['wsk'],
      prep['b1'], prep['b2'], prep['s3'], prep['b3'], mask)

    # (M, W*Cout) rows are NHWC-contiguous; extract the H data rows per image
    # (sublane-aligned slice) and transpose back to NCHW to match the module.
    out = out.reshape(N, Hrp, W, Cout)[:, :H]
    return jnp.transpose(out, (0, 3, 1, 2))


def encoder_block_ref(x_nchw, params):
    """Pure-JAX reference (inference-mode BN), NCHW in / NCHW out."""
    w1, w2, w3, bn1, bn2, bn3 = params
    x = jnp.transpose(x_nchw, (0, 2, 3, 1))

    def conv(a, w):
        return jax.lax.conv_general_dilated(
            a, w, (1, 1), 'SAME',
            dimension_numbers=('NHWC', 'HWIO', 'NHWC'),
            precision=jax.lax.Precision.HIGHEST)

    def bn(a, p, eps=1e-5):
        g, b, m, v = p
        return (a - m) / jnp.sqrt(v + eps) * g + b

    out = jnp.maximum(bn(conv(x, w1), bn1), 0.0)
    out = jnp.maximum(bn(conv(out, w2), bn2), 0.0)
    out = bn(conv(x, w3) + out, bn3)
    return jnp.transpose(out, (0, 3, 1, 2))


if __name__ == "__main__":
    N, Cin, Cout, H, W = 2, 4, 8, 16, 16

    key = jax.random.PRNGKey(0)
    ks = jax.random.split(key, 16)

    x = jax.random.normal(ks[0], (N, Cin, H, W), jnp.float32)
    w1 = 0.2 * jax.random.normal(ks[1], (3, 3, Cin, Cout), jnp.float32)   # conv1 (HWIO)
    w2 = 0.2 * jax.random.normal(ks[2], (3, 3, Cout, Cout), jnp.float32)  # conv2 (HWIO)
    w3 = 0.2 * jax.random.normal(ks[3], (1, 1, Cin, Cout), jnp.float32)   # conv3 (1x1)

    def bn_params(k1, k2, k3, k4):
        g = 1.0 + 0.1 * jax.random.normal(k1, (Cout,), jnp.float32)
        b = 0.1 * jax.random.normal(k2, (Cout,), jnp.float32)
        m = 0.1 * jax.random.normal(k3, (Cout,), jnp.float32)
        v = jax.random.uniform(k4, (Cout,), jnp.float32, minval=0.5, maxval=1.5)
        return (g, b, m, v)

    bn1 = bn_params(ks[4], ks[5], ks[6], ks[7])
    bn2 = bn_params(ks[8], ks[9], ks[10], ks[11])
    bn3 = bn_params(ks[12], ks[13], ks[14], ks[15])

    params = (w1, w2, w3, bn1, bn2, bn3)

    # One-time parameter folding (hoisted out of the per-call path).
    prep = prepare_encoder_block_params(params, H, W)

    out = encoder_block_pallas(x, prep)
    out = jax.block_until_ready(out)

    ref = encoder_block_ref(x, params)
    np.testing.assert_allclose(np.asarray(out), np.asarray(ref), rtol=2e-3, atol=2e-3)

    print("KERNEL_OK")
</pallas_src>

<mosaic_0001>
module attributes {stable_mosaic.version = 11 : i64} {
  func.func @_encoder_block_kernel(%arg0: i32, %arg1: memref<48x64xf32, #tpu.memory_space<vmem>>, %arg2: memref<3x64x128xf32, #tpu.memory_space<vmem>>, %arg3: memref<3x128x128xf32, #tpu.memory_space<vmem>>, %arg4: memref<64x128xf32, #tpu.memory_space<vmem>>, %arg5: memref<1x128xf32, #tpu.memory_space<vmem>>, %arg6: memref<1x128xf32, #tpu.memory_space<vmem>>, %arg7: memref<1x128xf32, #tpu.memory_space<vmem>>, %arg8: memref<1x128xf32, #tpu.memory_space<vmem>>, %arg9: memref<48x1xf32, #tpu.memory_space<vmem>>, %arg10: memref<48x128xf32, #tpu.memory_space<vmem>>) attributes {dimension_semantics = [#tpu.dimension_semantics<arbitrary>], iteration_bounds = array<i64: 1>, scalar_prefetch = 0 : i64, scratch_operands = 0 : i64, tpu.core_type = #tpu.core_type<tc>, window_params = [{pipeline_mode = #tpu.pipeline_mode<synchronous>, transform_indices = @transform_0, window_bounds = array<i64: 48, 64>}, {pipeline_mode = #tpu.pipeline_mode<synchronous>, transform_indices = @transform_1, window_bounds = array<i64: 3, 64, 128>}, {pipeline_mode = #tpu.pipeline_mode<synchronous>, transform_indices = @transform_2, window_bounds = array<i64: 3, 128, 128>}, {pipeline_mode = #tpu.pipeline_mode<synchronous>, transform_indices = @transform_3, window_bounds = array<i64: 64, 128>}, {pipeline_mode = #tpu.pipeline_mode<synchronous>, transform_indices = @transform_4, window_bounds = array<i64: 1, 128>}, {pipeline_mode = #tpu.pipeline_mode<synchronous>, transform_indices = @transform_5, window_bounds = array<i64: 1, 128>}, {pipeline_mode = #tpu.pipeline_mode<synchronous>, transform_indices = @transform_6, window_bounds = array<i64: 1, 128>}, {pipeline_mode = #tpu.pipeline_mode<synchronous>, transform_indices = @transform_7, window_bounds = array<i64: 1, 128>}, {pipeline_mode = #tpu.pipeline_mode<synchronous>, transform_indices = @transform_8, window_bounds = array<i64: 48, 1>}, {pipeline_mode = #tpu.pipeline_mode<synchronous>, transform_indices = @transform_9, window_bounds = array<i64: 48, 128>}]} {
    %c0 = arith.constant 0 : index
    %c0_0 = arith.constant 0 : index
    %0 = vector.load %arg1[%c0, %c0_0] : memref<48x64xf32, #tpu.memory_space<vmem>>, vector<48x64xf32>
    %c0_1 = arith.constant 0 : index
    %c0_2 = arith.constant 0 : index
    %1 = vector.load %arg9[%c0_1, %c0_2] : memref<48x1xf32, #tpu.memory_space<vmem>>, vector<48x1xf32>
    %c0_3 = arith.constant 0 : index
    %c0_4 = arith.constant 0 : index
    %c0_5 = arith.constant 0 : index
    %2 = vector.load %arg2[%c0_3, %c0_4, %c0_5] : memref<3x64x128xf32, #tpu.memory_space<vmem>>, vector<1x64x128xf32>
    %3 = vector.shape_cast %2 : vector<1x64x128xf32> to vector<64x128xf32>
    %cst = arith.constant dense<0.000000e+00> : vector<48x128xf32>
    %4 = tpu.matmul %0, %3, %cst {dimension_numbers = #tpu.dot_dimension_numbers<[1], [0], [0], [1], [0, 0, 1, 1], [], []>} : vector<48x64xf32>, vector<64x128xf32>, vector<48x128xf32> -> vector<48x128xf32>
    %c1 = arith.constant 1 : index
    %c0_6 = arith.constant 0 : index
    %c0_7 = arith.constant 0 : index
    %5 = vector.load %arg2[%c1, %c0_6, %c0_7] : memref<3x64x128xf32, #tpu.memory_space<vmem>>, vector<1x64x128xf32>
    %6 = vector.shape_cast %5 : vector<1x64x128xf32> to vector<64x128xf32>
    %cst_8 = arith.constant dense<0.000000e+00> : vector<48x128xf32>
    %7 = tpu.matmul %0, %6, %cst_8 {dimension_numbers = #tpu.dot_dimension_numbers<[1], [0], [0], [1], [0, 0, 1, 1], [], []>} : vector<48x64xf32>, vector<64x128xf32>, vector<48x128xf32> -> vector<48x128xf32>
    %c2 = arith.constant 2 : index
    %c0_9 = arith.constant 0 : index
    %c0_10 = arith.constant 0 : index
    %8 = vector.load %arg2[%c2, %c0_9, %c0_10] : memref<3x64x128xf32, #tpu.memory_space<vmem>>, vector<1x64x128xf32>
    %9 = vector.shape_cast %8 : vector<1x64x128xf32> to vector<64x128xf32>
    %cst_11 = arith.constant dense<0.000000e+00> : vector<48x128xf32>
    %10 = tpu.matmul %0, %9, %cst_11 {dimension_numbers = #tpu.dot_dimension_numbers<[1], [0], [0], [1], [0, 0, 1, 1], [], []>} : vector<48x64xf32>, vector<64x128xf32>, vector<48x128xf32> -> vector<48x128xf32>
    %c1_i32 = arith.constant 1 : i32
    %11 = tpu.dynamic_rotate %4 by %c1_i32 dim 0 : vector<48x128xf32>, i32 -> vector<48x128xf32>
    %12 = arith.addf %11, %7 : vector<48x128xf32>
    %c47_i32 = arith.constant 47 : i32
    %13 = tpu.dynamic_rotate %10 by %c47_i32 dim 0 : vector<48x128xf32>, i32 -> vector<48x128xf32>
    %14 = arith.addf %12, %13 : vector<48x128xf32>
    %c0_12 = arith.constant 0 : index
    %c0_13 = arith.constant 0 : index
    %15 = vector.load %arg5[%c0_12, %c0_13] : memref<1x128xf32, #tpu.memory_space<vmem>>, vector<1x128xf32>
    %16 = vector.broadcast %15 : vector<1x128xf32> to vector<48x128xf32>
    %17 = arith.addf %14, %16 : vector<48x128xf32>
    %cst_14 = arith.constant 0.000000e+00 : f32
    %18 = vector.broadcast %cst_14 : f32 to vector<48x128xf32>
    %19 = arith.maximumf %17, %18 : vector<48x128xf32>
    %20 = vector.broadcast %1 : vector<48x1xf32> to vector<48x128xf32>
    %21 = arith.mulf %19, %20 : vector<48x128xf32>
    %c0_15 = arith.constant 0 : index
    %c0_16 = arith.constant 0 : index
    %c0_17 = arith.constant 0 : index
    %22 = vector.load %arg3[%c0_15, %c0_16, %c0_17] : memref<3x128x128xf32, #tpu.memory_space<vmem>>, vector<1x128x128xf32>
    %23 = vector.shape_cast %22 : vector<1x128x128xf32> to vector<128x128xf32>
    %cst_18 = arith.constant dense<0.000000e+00> : vector<48x128xf32>
    %24 = tpu.matmul %21, %23, %cst_18 {dimension_numbers = #tpu.dot_dimension_numbers<[1], [0], [0], [1], [0, 0, 1, 1], [], []>} : vector<48x128xf32>, vector<128x128xf32>, vector<48x128xf32> -> vector<48x128xf32>
    %c1_19 = arith.constant 1 : index
    %c0_20 = arith.constant 0 : index
    %c0_21 = arith.constant 0 : index
    %25 = vector.load %arg3[%c1_19, %c0_20, %c0_21] : memref<3x128x128xf32, #tpu.memory_space<vmem>>, vector<1x128x128xf32>
    %26 = vector.shape_cast %25 : vector<1x128x128xf32> to vector<128x128xf32>
    %cst_22 = arith.constant dense<0.000000e+00> : vector<48x128xf32>
    %27 = tpu.matmul %21, %26, %cst_22 {dimension_numbers = #tpu.dot_dimension_numbers<[1], [0], [0], [1], [0, 0, 1, 1], [], []>} : vector<48x128xf32>, vector<128x128xf32>, vector<48x128xf32> -> vector<48x128xf32>
    %c2_23 = arith.constant 2 : index
    %c0_24 = arith.constant 0 : index
    %c0_25 = arith.constant 0 : index
    %28 = vector.load %arg3[%c2_23, %c0_24, %c0_25] : memref<3x128x128xf32, #tpu.memory_space<vmem>>, vector<1x128x128xf32>
    %29 = vector.shape_cast %28 : vector<1x128x128xf32> to vector<128x128xf32>
    %cst_26 = arith.constant dense<0.000000e+00> : vector<48x128xf32>
    %30 = tpu.matmul %21, %29, %cst_26 {dimension_numbers = #tpu.dot_dimension_numbers<[1], [0], [0], [1], [0, 0, 1, 1], [], []>} : vector<48x128xf32>, vector<128x128xf32>, vector<48x128xf32> -> vector<48x128xf32>
    %c1_i32_27 = arith.constant 1 : i32
    %31 = tpu.dynamic_rotate %24 by %c1_i32_27 dim 0 : vector<48x128xf32>, i32 -> vector<48x128xf32>
    %32 = arith.addf %31, %27 : vector<48x128xf32>
    %c47_i32_28 = arith.constant 47 : i32
    %33 = tpu.dynamic_rotate %30 by %c47_i32_28 dim 0 : vector<48x128xf32>, i32 -> vector<48x128xf32>
    %34 = arith.addf %32, %33 : vector<48x128xf32>
    %c0_29 = arith.constant 0 : index
    %c0_30 = arith.constant 0 : index
    %35 = vector.load %arg6[%c0_29, %c0_30] : memref<1x128xf32, #tpu.memory_space<vmem>>, vector<1x128xf32>
    %36 = vector.broadcast %35 : vector<1x128xf32> to vector<48x128xf32>
    %37 = arith.addf %34, %36 : vector<48x128xf32>
    %cst_31 = arith.constant 0.000000e+00 : f32
    %38 = vector.broadcast %cst_31 : f32 to vector<48x128xf32>
    %39 = arith.maximumf %37, %38 : vector<48x128xf32>
    %c0_32 = arith.constant 0 : index
    %c0_33 = arith.constant 0 : index
    %40 = vector.load %arg4[%c0_32, %c0_33] : memref<64x128xf32, #tpu.memory_space<vmem>>, vector<64x128xf32>
    %cst_34 = arith.constant dense<0.000000e+00> : vector<48x128xf32>
    %41 = tpu.matmul %0, %40, %cst_34 {dimension_numbers = #tpu.dot_dimension_numbers<[1], [0], [0], [1], [0, 0, 1, 1], [], []>} : vector<48x64xf32>, vector<64x128xf32>, vector<48x128xf32> -> vector<48x128xf32>
    %42 = arith.addf %41, %39 : vector<48x128xf32>
    %c0_35 = arith.constant 0 : index
    %c0_36 = arith.constant 0 : index
    %43 = vector.load %arg7[%c0_35, %c0_36] : memref<1x128xf32, #tpu.memory_space<vmem>>, vector<1x128xf32>
    %44 = vector.broadcast %43 : vector<1x128xf32> to vector<48x128xf32>
    %45 = arith.mulf %42, %44 : vector<48x128xf32>
    %c0_37 = arith.constant 0 : index
    %c0_38 = arith.constant 0 : index
    %46 = vector.load %arg8[%c0_37, %c0_38] : memref<1x128xf32, #tpu.memory_space<vmem>>, vector<1x128xf32>
    %47 = vector.broadcast %46 : vector<1x128xf32> to vector<48x128xf32>
    %48 = arith.addf %45, %47 : vector<48x128xf32>
    %c0_39 = arith.constant 0 : index
    %c0_40 = arith.constant 0 : index
    %49 = vector.load %arg10[%c0_39, %c0_40] : memref<48x128xf32, #tpu.memory_space<vmem>>, vector<48x128xf32>
    tpu.vector_store %arg10[%c0_39, %c0_40], %48 {strides = array<i32>} : memref<48x128xf32, #tpu.memory_space<vmem>>, vector<48x128xf32>,
    return
  }
  func.func @transform_0(%arg0: i32) -> (i32, i32) {
    %c0_i32 = arith.constant 0 : i32
    %c0_i32_0 = arith.constant 0 : i32
    %c0_i32_1 = arith.constant 0 : i32
    return %c0_i32, %c0_i32_0 : i32, i32
  }
  func.func @transform_1(%arg0: i32) -> (i32, i32, i32) {
    %c0_i32 = arith.constant 0 : i32
    %c0_i32_0 = arith.constant 0 : i32
    %c0_i32_1 = arith.constant 0 : i32
    %c0_i32_2 = arith.constant 0 : i32
    return %c0_i32, %c0_i32_0, %c0_i32_1 : i32, i32, i32
  }
  func.func @transform_2(%arg0: i32) -> (i32, i32, i32) {
    %c0_i32 = arith.constant 0 : i32
    %c0_i32_0 = arith.constant 0 : i32
    %c0_i32_1 = arith.constant 0 : i32
    %c0_i32_2 = arith.constant 0 : i32
    return %c0_i32, %c0_i32_0, %c0_i32_1 : i32, i32, i32
  }
  func.func @transform_3(%arg0: i32) -> (i32, i32) {
    %c0_i32 = arith.constant 0 : i32
    %c0_i32_0 = arith.constant 0 : i32
    %c0_i32_1 = arith.constant 0 : i32
    return %c0_i32, %c0_i32_0 : i32, i32
  }
  func.func @transform_4(%arg0: i32) -> (i32, i32) {
    %c0_i32 = arith.constant 0 : i32
    %c0_i32_0 = arith.constant 0 : i32
    %c0_i32_1 = arith.constant 0 : i32
    return %c0_i32, %c0_i32_0 : i32, i32
  }
  func.func @transform_5(%arg0: i32) -> (i32, i32) {
    %c0_i32 = arith.constant 0 : i32
    %c0_i32_0 = arith.constant 0 : i32
    %c0_i32_1 = arith.constant 0 : i32
    return %c0_i32, %c0_i32_0 : i32, i32
  }
  func.func @transform_6(%arg0: i32) -> (i32, i32) {
    %c0_i32 = arith.constant 0 : i32
    %c0_i32_0 = arith.constant 0 : i32
    %c0_i32_1 = arith.constant 0 : i32
    return %c0_i32, %c0_i32_0 : i32, i32
  }
  func.func @transform_7(%arg0: i32) -> (i32, i32) {
    %c0_i32 = arith.constant 0 : i32
    %c0_i32_0 = arith.constant 0 : i32
    %c0_i32_1 = arith.constant 0 : i32
    return %c0_i32, %c0_i32_0 : i32, i32
  }
  func.func @transform_8(%arg0: i32) -> (i32, i32) {
    %c0_i32 = arith.constant 0 : i32
    %c0_i32_0 = arith.constant 0 : i32
    %c0_i32_1 = arith.constant 0 : i32
    return %c0_i32, %c0_i32_0 : i32, i32
  }
  func.func @transform_9(%arg0: i32) -> (i32, i32) {
    %c0_i32 = arith.constant 0 : i32
    %c0_i32_0 = arith.constant 0 : i32
    %c0_i32_1 = arith.constant 0 : i32
    return %c0_i32, %c0_i32_0 : i32, i32
  }
}

</mosaic_0001>

<llo_original>
// kernel: encoder_block_pallas.1
$region0: #{encoder_block_pallas.1}
  #allocation0 [shape = 'u32[]', space=smem, size = 0x4, offset = 0x4, fixed_abs, tag = 'smem constant byte address 0x4 - core index']
  #allocation1 [shape = 'u32[144,128]{1,0:T(1,128)}', space=vmem, size = 0x12000, scoped, tag = 'internal scratch']
  %s0 = inlined_call_operand.vmem [shape: f32[48,64], index: 0, kind: input, shape index: {}]
  %s1 = inlined_call_operand.hbm [shape: f32[3,64,128], index: 1, kind: input, shape index: {}]
  %s2 = inlined_call_operand.vmem [shape: f32[3,128,128], index: 2, kind: input, shape index: {}]
  %s3 = inlined_call_operand.vmem [shape: f32[64,128], index: 3, kind: input, shape index: {}]
  %s4 = inlined_call_operand.vmem [shape: f32[1,128], index: 4, kind: input, shape index: {}]
  %s5 = inlined_call_operand.vmem [shape: f32[1,128], index: 5, kind: input, shape index: {}]
  %s6 = inlined_call_operand.vmem [shape: f32[1,128], index: 6, kind: input, shape index: {}]
  %s7 = inlined_call_operand.vmem [shape: f32[1,128], index: 7, kind: input, shape index: {}]
  %s8 = inlined_call_operand.vmem [shape: f32[48,1], index: 8, kind: input, shape index: {}]
  %s9 = inlined_call_operand.vmem [shape: f32[48,128], index: 9, kind: output, shape index: {}]
  %s10 = sld [smem:[#allocation0]]
  $region50: #{encoder_block_pallas.1} parent=0
    _
  %s12 = ssub.s32 1, %s10
  %s13 = scalar_select 0, %s12, %s10
  $region1: #{encoder_block_pallas.1} parent=0
    #allocation2 [shape = 'u8[98304]{0}', space=vmem, size = 0x18000, scoped, tag = 'input window, operand 1, single buffered']
    #allocation3 [shape = 's32[1]{0}', space=sflag, size = 0x4, scoped, tag = 'scoped memory for encoder_block_pallas.1']
    %14 = vsyncpa [#allocation3], 0
    // Predicated region
    $region2: #{encoder_block_pallas.1} parent=1 // pred_check
      _
    $region3: #{encoder_block_pallas.1} parent=1 // pred_check_branch
      %16 = sbr.rel (0) target = $region5
    $region4: #{encoder_block_pallas.1} parent=1 // pred_region
      _
    $region5: #{encoder_block_pallas.1} parent=1 // pred_fallthru
      _
    // Predicated region
    $region6: #{encoder_block_pallas.1} parent=1 // pred_check
      _
    $region7: #{encoder_block_pallas.1} parent=1 // pred_check_branch
      %18 = sbr.rel (0) target = $region9
    $region8: #{encoder_block_pallas.1} parent=1 // pred_region
      %s20 = ssub.s32 3072, 3072
      %21 = vsyncadd [#allocation3], %s20
      %s22 = sshll.u32 [#allocation2], 4
      %s23 = int_to_ptr.vmem [resolvable:$true] %s22
      %28 = dma.hbm_to_vmem [thread:$0]  %s1, 3072, %s23, [#allocation3], 128, 128, 8
    $region9: #{encoder_block_pallas.1} parent=1 // pred_fallthru
      _
    // Predicated region
    $region10: #{encoder_block_pallas.1} parent=1 // pred_check
      _
    $region11: #{encoder_block_pallas.1} parent=1 // pred_check_branch
      %30 = sbr.rel (0) target = $region13
    $region12: #{encoder_block_pallas.1} parent=1 // pred_region
      _
    $region13: #{encoder_block_pallas.1} parent=1 // pred_fallthru
      _
    // Predicated region
    $region14: #{encoder_block_pallas.1} parent=1 // pred_check
      _
    $region15: #{encoder_block_pallas.1} parent=1 // pred_check_branch
      %32 = sbr.rel (0) target = $region17
    $region16: #{encoder_block_pallas.1} parent=1 // pred_region
      _
    $region17: #{encoder_block_pallas.1} parent=1 // pred_fallthru
      _
    // Predicated region
    $region18: #{encoder_block_pallas.1} parent=1 // pred_check
      _
    $region19: #{encoder_block_pallas.1} parent=1 // pred_check_branch
      %34 = sbr.rel (0) target = $region21
    $region20: #{encoder_block_pallas.1} parent=1 // pred_region
      _
    $region21: #{encoder_block_pallas.1} parent=1 // pred_fallthru
      _
    // Predicated region
    $region22: #{encoder_block_pallas.1} parent=1 // pred_check
      _
    $region23: #{encoder_block_pallas.1} parent=1 // pred_check_branch
      %36 = sbr.rel (0) target = $region25
    $region24: #{encoder_block_pallas.1} parent=1 // pred_region
      _
    $region25: #{encoder_block_pallas.1} parent=1 // pred_fallthru
      _
    // Predicated region
    $region26: #{encoder_block_pallas.1} parent=1 // pred_check
      _
    $region27: #{encoder_block_pallas.1} parent=1 // pred_check_branch
      %38 = sbr.rel (0) target = $region29
    $region28: #{encoder_block_pallas.1} parent=1 // pred_region
      _
    $region29: #{encoder_block_pallas.1} parent=1 // pred_fallthru
      _
    // Predicated region
    $region30: #{encoder_block_pallas.1} parent=1 // pred_check
      _
    $region31: #{encoder_block_pallas.1} parent=1 // pred_check_branch
      %40 = sbr.rel (0) target = $region33
    $region32: #{encoder_block_pallas.1} parent=1 // pred_region
      _
    $region33: #{encoder_block_pallas.1} parent=1 // pred_fallthru
      _
    // Predicated region
    $region34: #{encoder_block_pallas.1} parent=1 // pred_check
      _
    $region35: #{encoder_block_pallas.1} parent=1 // pred_check_branch
      %42 = sbr.rel (0) target = $region37
    $region36: #{encoder_block_pallas.1} parent=1 // pred_region
      _
    $region37: #{encoder_block_pallas.1} parent=1 // pred_fallthru
      _
    // Predicated region
    $region38: #{encoder_block_pallas.1} parent=1 // pred_check
      _
    $region39: #{encoder_block_pallas.1} parent=1 // pred_check_branch
      %44 = sbr.rel (0) target = $region41
    $region40: #{encoder_block_pallas.1} parent=1 // pred_region
      %45 = dma.done [#allocation3], 3072
    $region41: #{encoder_block_pallas.1} parent=1 // pred_fallthru
      _
    %v46 = vld [vmem:[%s0] sm:$0xff]
    %v47 = vld [vmem:[%s0 + $0x8] sm:$0xff]
    %v48 = vld [vmem:[%s0 + $0x10] sm:$0xff]
    %v49 = vld [vmem:[%s0 + $0x18] sm:$0xff]
    %v50 = vld [vmem:[%s0 + $0x20] sm:$0xff]
    %v51 = vld [vmem:[%s0 + $0x28] sm:$0xff]
    %v52 = vld [vmem:[%s8] sm:$0xff]
    %v53 = vld [vmem:[%s8 + $0x8] sm:$0xff]
    %v54 = vld [vmem:[%s8 + $0x10] sm:$0xff]
    %v55 = vld [vmem:[%s8 + $0x18] sm:$0xff]
    %v56 = vld [vmem:[%s8 + $0x20] sm:$0xff]
    %v57 = vld [vmem:[%s8 + $0x28] sm:$0xff]
    %v58 = vld [vmem:[#allocation2] sm:$0xff]
    %v59 = vld [vmem:[#allocation2 + $0x8] sm:$0xff]
    %v60 = vld [vmem:[#allocation2 + $0x10] sm:$0xff]
    %v61 = vld [vmem:[#allocation2 + $0x18] sm:$0xff]
    %v62 = vld [vmem:[#allocation2 + $0x20] sm:$0xff]
    %v63 = vld [vmem:[#allocation2 + $0x28] sm:$0xff]
    %v64 = vld [vmem:[#allocation2 + $0x30] sm:$0xff]
    %v65 = vld [vmem:[#allocation2 + $0x38] sm:$0xff]
    %vm66 = vcmask 523264
    %v68 = vsel %vm66, %v46, 0
    %v71 = vsel %vm66, %v47, 0
    %v74 = vsel %vm66, %v48, 0
    %v77 = vsel %vm66, %v49, 0
    %v80 = vsel %vm66, %v50, 0
    %v83 = vsel %vm66, %v51, 0
    %85 = vmatprep.subr.mxu0 0.0
    %86 = vmatpush1.msra.mxu0 0.0
    %87 = vmatprep.subr.mxu0 0.0
    %88 = vmatpush1.msra.mxu0 0.0
    %89 = vmatprep.subr.mxu0 0.0
    %90 = vmatpush1.msra.mxu0 0.0
    %91 = vmatprep.subr.mxu0 0.0
    %92 = vmatpush1.msra.mxu0 0.0
    %93 = vmatprep.subr.mxu0 0.0
    %94 = vmatpush1.msra.mxu0 0.0
    %95 = vmatprep.subr.mxu0 0.0
    %96 = vmatpush1.msra.mxu0 0.0
    %97 = vmatprep.subr.mxu0 0.0
    %98 = vmatpush1.msra.mxu0 0.0
    %99 = vmatprep.subr.mxu0 0.0
    %100 = vmatpush1.msra.mxu0 0.0
    %101 = vmatprep.subr.mxu0 0.0
    %102 = vmatpush1.msra.mxu0 %v65
    %103 = vmatprep.subr.mxu0 0.0
    %104 = vmatpush1.msra.mxu0 %v64
    %105 = vmatprep.subr.mxu0 0.0
    %106 = vmatpush1.msra.mxu0 %v63
    %107 = vmatprep.subr.mxu0 0.0
    %108 = vmatpush1.msra.mxu0 %v62
    %109 = vmatprep.subr.mxu0 0.0
    %110 = vmatpush1.msra.mxu0 %v61
    %111 = vmatprep.subr.mxu0 0.0
    %112 = vmatpush1.msra.mxu0 %v60
    %113 = vmatprep.subr.mxu0 0.0
    %114 = vmatpush1.msra.mxu0 %v59
    %115 = vmatprep.subr.mxu0 0.0
    %116 = vmatpush1.msra.mxu0 %v58
    %117 = vmatprep.subr.mxu0 0.0
    %118 = vmatpush2.msra.mxu0 0.0
    %119 = vmatprep.subr.mxu0 0.0
    %120 = vmatpush2.msra.mxu0 0.0
    %121 = vmatprep.subr.mxu0 0.0
    %122 = vmatpush2.msra.mxu0 0.0
    %123 = vmatprep.subr.mxu0 0.0
    %124 = vmatpush2.msra.mxu0 0.0
    %125 = vmatprep.subr.mxu0 0.0
    %126 = vmatpush2.msra.mxu0 0.0
    %127 = vmatprep.subr.mxu0 0.0
    %128 = vmatpush2.msra.mxu0 0.0
    %129 = vmatprep.subr.mxu0 0.0
    %130 = vmatpush2.msra.mxu0 0.0
    %131 = vmatprep.subr.mxu0 0.0
    %132 = vmatpush2.msra.mxu0 0.0
    %133 = vmatprep.subr.mxu0 0.0
    %134 = vmatpush2.msra.mxu0 0.0
    %135 = vmatprep.subr.mxu0 0.0
    %136 = vmatpush2.msra.mxu0 0.0
    %137 = vmatprep.subr.mxu0 0.0
    %138 = vmatpush2.msra.mxu0 0.0
    %139 = vmatprep.subr.mxu0 0.0
    %140 = vmatpush2.msra.mxu0 0.0
    %141 = vmatprep.subr.mxu0 0.0
    %142 = vmatpush2.msra.mxu0 0.0
    %143 = vmatprep.subr.mxu0 0.0
    %144 = vmatpush2.msra.mxu0 0.0
    %145 = vmatprep.subr.mxu0 0.0
    %146 = vmatpush2.msra.mxu0 0.0
    %147 = vmatprep.subr.mxu0 0.0
    %148 = vmatpush2.msra.mxu0 0.0
    %149 = vmatprep.mubr.f32.mxu0 0.0
    %150 = vmatmul.mubr.f32.gmra.mxu0 %v68
    %v151 = vpop.f32.mrf.mxu0
    %v152 = vadd.f32 0.0, %v151
    %v153 = vpop.f32.mrf.mxu0
    %154 = vmatprep.mubr.f32.mxu0 0.0
    %155 = vmatmul.mubr.f32.gmra.mxu0 %v71
    %v156 = vpop.f32.mrf.mxu0
    %v157 = vadd.f32 0.0, %v156
    %v158 = vpop.f32.mrf.mxu0
    %159 = vmatprep.mubr.f32.mxu0 0.0
    %160 = vmatmul.mubr.f32.gmra.mxu0 %v74
    %v161 = vpop.f32.mrf.mxu0
    %v162 = vadd.f32 0.0, %v161
    %v163 = vpop.f32.mrf.mxu0
    %164 = vmatprep.mubr.f32.mxu0 0.0
    %165 = vmatmul.mubr.f32.gmra.mxu0 %v77
    %v166 = vpop.f32.mrf.mxu0
    %v167 = vadd.f32 0.0, %v166
    %v168 = vpop.f32.mrf.mxu0
    %169 = vmatprep.mubr.f32.mxu0 0.0
    %170 = vmatmul.mubr.f32.gmra.mxu0 %v80
    %v171 = vpop.f32.mrf.mxu0
    %v172 = vadd.f32 0.0, %v171
    %v173 = vpop.f32.mrf.mxu0
    %174 = vmatprep.mubr.f32.mxu0 0.0
    %175 = vmatmul.mubr.f32.gmra.mxu0 %v83
    %v176 = vpop.f32.mrf.mxu0
    %v177 = vadd.f32 0.0, %v176
    %v178 = vpop.f32.mrf.mxu0
    %179 = vdwg.mxu0
    %s180 = scalar_lea.vmem [#allocation2], 64
    %v181 = vld [vmem:[%s180] sm:$0xff]
    %v182 = vld [vmem:[%s180 + $0x8] sm:$0xff]
    %v183 = vld [vmem:[%s180 + $0x10] sm:$0xff]
    %v184 = vld [vmem:[%s180 + $0x18] sm:$0xff]
    %v185 = vld [vmem:[%s180 + $0x20] sm:$0xff]
    %v186 = vld [vmem:[%s180 + $0x28] sm:$0xff]
    %v187 = vld [vmem:[%s180 + $0x30] sm:$0xff]
    %v188 = vld [vmem:[%s180 + $0x38] sm:$0xff]
    %189 = vmatprep.subr.mxu0 0.0
    %190 = vmatpush1.msra.mxu0 0.0
    %191 = vmatprep.subr.mxu0 0.0
    %192 = vmatpush1.msra.mxu0 0.0
    %193 = vmatprep.subr.mxu0 0.0
    %194 = vmatpush1.msra.mxu0 0.0
    %195 = vmatprep.subr.mxu0 0.0
    %196 = vmatpush1.msra.mxu0 0.0
    %197 = vmatprep.subr.mxu0 0.0
    %198 = vmatpush1.msra.mxu0 0.0
    %199 = vmatprep.subr.mxu0 0.0
    %200 = vmatpush1.msra.mxu0 0.0
    %201 = vmatprep.subr.mxu0 0.0
    %202 = vmatpush1.msra.mxu0 0.0
    %203 = vmatprep.subr.mxu0 0.0
    %204 = vmatpush1.msra.mxu0 0.0
    %205 = vmatprep.subr.mxu0 0.0
    %206 = vmatpush1.msra.mxu0 %v188
    %207 = vmatprep.subr.mxu0 0.0
    %208 = vmatpush1.msra.mxu0 %v187
    %209 = vmatprep.subr.mxu0 0.0
    %210 = vmatpush1.msra.mxu0 %v186
    %211 = vmatprep.subr.mxu0 0.0
    %212 = vmatpush1.msra.mxu0 %v185
    %213 = vmatprep.subr.mxu0 0.0
    %214 = vmatpush1.msra.mxu0 %v184
    %215 = vmatprep.subr.mxu0 0.0
    %216 = vmatpush1.msra.mxu0 %v183
    %217 = vmatprep.subr.mxu0 0.0
    %218 = vmatpush1.msra.mxu0 %v182
    %219 = vmatprep.subr.mxu0 0.0
    %220 = vmatpush1.msra.mxu0 %v181
    %221 = vmatprep.subr.mxu0 0.0
    %222 = vmatpush2.msra.mxu0 0.0
    %223 = vmatprep.subr.mxu0 0.0
    %224 = vmatpush2.msra.mxu0 0.0
    %225 = vmatprep.subr.mxu0 0.0
    %226 = vmatpush2.msra.mxu0 0.0
    %227 = vmatprep.subr.mxu0 0.0
    %228 = vmatpush2.msra.mxu0 0.0
    %229 = vmatprep.subr.mxu0 0.0
    %230 = vmatpush2.msra.mxu0 0.0
    %231 = vmatprep.subr.mxu0 0.0
    %232 = vmatpush2.msra.mxu0 0.0
    %233 = vmatprep.subr.mxu0 0.0
    %234 = vmatpush2.msra.mxu0 0.0
    %235 = vmatprep.subr.mxu0 0.0
    %236 = vmatpush2.msra.mxu0 0.0
    %237 = vmatprep.subr.mxu0 0.0
    %238 = vmatpush2.msra.mxu0 0.0
    %239 = vmatprep.subr.mxu0 0.0
    %240 = vmatpush2.msra.mxu0 0.0
    %241 = vmatprep.subr.mxu0 0.0
    %242 = vmatpush2.msra.mxu0 0.0
    %243 = vmatprep.subr.mxu0 0.0
    %244 = vmatpush2.msra.mxu0 0.0
    %245 = vmatprep.subr.mxu0 0.0
    %246 = vmatpush2.msra.mxu0 0.0
    %247 = vmatprep.subr.mxu0 0.0
    %248 = vmatpush2.msra.mxu0 0.0
    %249 = vmatprep.subr.mxu0 0.0
    %250 = vmatpush2.msra.mxu0 0.0
    %251 = vmatprep.subr.mxu0 0.0
    %252 = vmatpush2.msra.mxu0 0.0
    %253 = vmatprep.mubr.f32.mxu0 0.0
    %254 = vmatmul.mubr.f32.gmra.mxu0 %v68
    %v255 = vpop.f32.mrf.mxu0
    %v256 = vadd.f32 0.0, %v255
    %v257 = vpop.f32.mrf.mxu0
    %258 = vmatprep.mubr.f32.mxu0 0.0
    %259 = vmatmul.mubr.f32.gmra.mxu0 %v71
    %v260 = vpop.f32.mrf.mxu0
    %v261 = vadd.f32 0.0, %v260
    %v262 = vpop.f32.mrf.mxu0
    %263 = vmatprep.mubr.f32.mxu0 0.0
    %264 = vmatmul.mubr.f32.gmra.mxu0 %v74
    %v265 = vpop.f32.mrf.mxu0
    %v266 = vadd.f32 0.0, %v265
    %v267 = vpop.f32.mrf.mxu0
    %268 = vmatprep.mubr.f32.mxu0 0.0
    %269 = vmatmul.mubr.f32.gmra.mxu0 %v77
    %v270 = vpop.f32.mrf.mxu0
    %v271 = vadd.f32 0.0, %v270
    %v272 = vpop.f32.mrf.mxu0
    %273 = vmatprep.mubr.f32.mxu0 0.0
    %274 = vmatmul.mubr.f32.gmra.mxu0 %v80
    %v275 = vpop.f32.mrf.mxu0
    %v276 = vadd.f32 0.0, %v275
    %v277 = vpop.f32.mrf.mxu0
    %278 = vmatprep.mubr.f32.mxu0 0.0
    %279 = vmatmul.mubr.f32.gmra.mxu0 %v83
    %v280 = vpop.f32.mrf.mxu0
    %v281 = vadd.f32 0.0, %v280
    %v282 = vpop.f32.mrf.mxu0
    %283 = vdwg.mxu0
    %s284 = scalar_lea.vmem [#allocation2], 128
    %v285 = vld [vmem:[%s284] sm:$0xff]
    %v286 = vld [vmem:[%s284 + $0x8] sm:$0xff]
    %v287 = vld [vmem:[%s284 + $0x10] sm:$0xff]
    %v288 = vld [vmem:[%s284 + $0x18] sm:$0xff]
    %v289 = vld [vmem:[%s284 + $0x20] sm:$0xff]
    %v290 = vld [vmem:[%s284 + $0x28] sm:$0xff]
    %v291 = vld [vmem:[%s284 + $0x30] sm:$0xff]
    %v292 = vld [vmem:[%s284 + $0x38] sm:$0xff]
    %293 = vmatprep.subr.mxu0 0.0
    %294 = vmatpush1.msra.mxu0 0.0
    %295 = vmatprep.subr.mxu0 0.0
    %296 = vmatpush1.msra.mxu0 0.0
    %297 = vmatprep.subr.mxu0 0.0
    %298 = vmatpush1.msra.mxu0 0.0
    %299 = vmatprep.subr.mxu0 0.0
    %300 = vmatpush1.msra.mxu0 0.0
    %301 = vmatprep.subr.mxu0 0.0
    %302 = vmatpush1.msra.mxu0 0.0
    %303 = vmatprep.subr.mxu0 0.0
    %304 = vmatpush1.msra.mxu0 0.0
    %305 = vmatprep.subr.mxu0 0.0
    %306 = vmatpush1.msra.mxu0 0.0
    %307 = vmatprep.subr.mxu0 0.0
    %308 = vmatpush1.msra.mxu0 0.0
    %309 = vmatprep.subr.mxu0 0.0
    %310 = vmatpush1.msra.mxu0 %v292
    %311 = vmatprep.subr.mxu0 0.0
    %312 = vmatpush1.msra.mxu0 %v291
    %313 = vmatprep.subr.mxu0 0.0
    %314 = vmatpush1.msra.mxu0 %v290
    %315 = vmatprep.subr.mxu0 0.0
    %316 = vmatpush1.msra.mxu0 %v289
    %317 = vmatprep.subr.mxu0 0.0
    %318 = vmatpush1.msra.mxu0 %v288
    %319 = vmatprep.subr.mxu0 0.0
    %320 = vmatpush1.msra.mxu0 %v287
    %321 = vmatprep.subr.mxu0 0.0
    %322 = vmatpush1.msra.mxu0 %v286
    %323 = vmatprep.subr.mxu0 0.0
    %324 = vmatpush1.msra.mxu0 %v285
    %325 = vmatprep.subr.mxu0 0.0
    %326 = vmatpush2.msra.mxu0 0.0
    %327 = vmatprep.subr.mxu0 0.0
    %328 = vmatpush2.msra.mxu0 0.0
    %329 = vmatprep.subr.mxu0 0.0
    %330 = vmatpush2.msra.mxu0 0.0
    %331 = vmatprep.subr.mxu0 0.0
    %332 = vmatpush2.msra.mxu0 0.0
    %333 = vmatprep.subr.mxu0 0.0
    %334 = vmatpush2.msra.mxu0 0.0
    %335 = vmatprep.subr.mxu0 0.0
    %336 = vmatpush2.msra.mxu0 0.0
    %337 = vmatprep.subr.mxu0 0.0
    %338 = vmatpush2.msra.mxu0 0.0
    %339 = vmatprep.subr.mxu0 0.0
    %340 = vmatpush2.msra.mxu0 0.0
    %341 = vmatprep.subr.mxu0 0.0
    %342 = vmatpush2.msra.mxu0 0.0
    %343 = vmatprep.subr.mxu0 0.0
    %344 = vmatpush2.msra.mxu0 0.0
    %345 = vmatprep.subr.mxu0 0.0
    %346 = vmatpush2.msra.mxu0 0.0
    %347 = vmatprep.subr.mxu0 0.0
    %348 = vmatpush2.msra.mxu0 0.0
    %349 = vmatprep.subr.mxu0 0.0
    %350 = vmatpush2.msra.mxu0 0.0
    %351 = vmatprep.subr.mxu0 0.0
    %352 = vmatpush2.msra.mxu0 0.0
    %353 = vmatprep.subr.mxu0 0.0
    %354 = vmatpush2.msra.mxu0 0.0
    %355 = vmatprep.subr.mxu0 0.0
    %356 = vmatpush2.msra.mxu0 0.0
    %357 = vmatprep.mubr.f32.mxu0 0.0
    %358 = vmatmul.mubr.f32.gmra.mxu0 %v68
    %v359 = vpop.f32.mrf.mxu0
    %v360 = vadd.f32 0.0, %v359
    %v361 = vpop.f32.mrf.mxu0
    %362 = vmatprep.mubr.f32.mxu0 0.0
    %363 = vmatmul.mubr.f32.gmra.mxu0 %v71
    %v364 = vpop.f32.mrf.mxu0
    %v365 = vadd.f32 0.0, %v364
    %v366 = vpop.f32.mrf.mxu0
    %367 = vmatprep.mubr.f32.mxu0 0.0
    %368 = vmatmul.mubr.f32.gmra.mxu0 %v74
    %v369 = vpop.f32.mrf.mxu0
    %v370 = vadd.f32 0.0, %v369
    %v371 = vpop.f32.mrf.mxu0
    %372 = vmatprep.mubr.f32.mxu0 0.0
    %373 = vmatmul.mubr.f32.gmra.mxu0 %v77
    %v374 = vpop.f32.mrf.mxu0
    %v375 = vadd.f32 0.0, %v374
    %v376 = vpop.f32.mrf.mxu0
    %377 = vmatprep.mubr.f32.mxu0 0.0
    %378 = vmatmul.mubr.f32.gmra.mxu0 %v80
    %v379 = vpop.f32.mrf.mxu0
    %v380 = vadd.f32 0.0, %v379
    %v381 = vpop.f32.mrf.mxu0
    %382 = vmatprep.mubr.f32.mxu0 0.0
    %383 = vmatmul.mubr.f32.gmra.mxu0 %v83
    %v384 = vpop.f32.mrf.mxu0
    %v385 = vadd.f32 0.0, %v384
    %v386 = vpop.f32.mrf.mxu0
    %387 = vdwg.mxu0
    %v388 = vrot.slane %v152, 7
    %v389 = vrot.slane %v157, 7
    %v390 = vrot.slane %v162, 7
    %v391 = vrot.slane %v167, 7
    %v392 = vrot.slane %v172, 7
    %v393 = vrot.slane %v177, 7
    %v394 = vlaneseq
    %v395 = vshrl.u32 %v394, 7
    %vm396 = vcmp.lt.s32.totalorder %v395, 1
    %v397 = vsel %vm396, %v392, %v393
    %v398 = vsel %vm396, %v391, %v392
    %v399 = vsel %vm396, %v390, %v391
    %v400 = vsel %vm396, %v389, %v390
    %v401 = vsel %vm396, %v388, %v389
    %v402 = vsel %vm396, %v393, %v388
    %v403 = vadd.f32 %v402, %v256
    %v404 = vadd.f32 %v401, %v261
    %v405 = vadd.f32 %v400, %v266
    %v406 = vadd.f32 %v399, %v271
    %v407 = vadd.f32 %v398, %v276
    %v408 = vadd.f32 %v397, %v281
    %v409 = vrot.slane %v360, 1
    %v410 = vrot.slane %v365, 1
    %v411 = vrot.slane %v370, 1
    %v412 = vrot.slane %v375, 1
    %v413 = vrot.slane %v380, 1
    %v414 = vrot.slane %v385, 1
    %vm415 = vcmp.lt.s32.totalorder %v395, 7
    %v416 = vsel %vm415, %v413, %v414
    %v417 = vsel %vm415, %v412, %v413
    %v418 = vsel %vm415, %v411, %v412
    %v419 = vsel %vm415, %v410, %v411
    %v420 = vsel %vm415, %v409, %v410
    %v421 = vsel %vm415, %v414, %v409
    %v422 = vadd.f32 %v403, %v420
    %v423 = vadd.f32 %v404, %v419
    %v424 = vadd.f32 %v405, %v418
    %v425 = vadd.f32 %v406, %v417
    %v426 = vadd.f32 %v407, %v416
    %v427 = vadd.f32 %v408, %v421
    %v428 = vld [vmem:[%s4] sm:$0x1]
    %v430 = vlaneseq
    %v431 = vshrl.u32 %v430, 7
    %v432 = vsub.s32 0, %v431
    %v433 = vrot.slane %v428, %v432
    %v435 = vadd.f32 %v422, %v433
    %v436 = vadd.f32 %v423, %v433
    %v437 = vadd.f32 %v424, %v433
    %v438 = vadd.f32 %v425, %v433
    %v439 = vadd.f32 %v426, %v433
    %v440 = vadd.f32 %v427, %v433
    %v441 = vmax.f32 %v435, 0.0
    %v442 = vmax.f32 %v436, 0.0
    %v443 = vmax.f32 %v437, 0.0
    %v444 = vmax.f32 %v438, 0.0
    %v445 = vmax.f32 %v439, 0.0
    %v446 = vmax.f32 %v440, 0.0
    %448 = vset.pattern.permute.xlu0 0
    %449 = vperm.xlu0 %448, %v52
    %v450 = vpop.permute.xlu0 %449
    %453 = vset.pattern.permute.xlu0 0
    %454 = vperm.xlu0 %453, %v53
    %v455 = vpop.permute.xlu0 %454
    %458 = vset.pattern.permute.xlu0 0
    %459 = vperm.xlu0 %458, %v54
    %v460 = vpop.permute.xlu0 %459
    %463 = vset.pattern.permute.xlu0 0
    %464 = vperm.xlu0 %463, %v55
    %v465 = vpop.permute.xlu0 %464
    %468 = vset.pattern.permute.xlu0 0
    %469 = vperm.xlu0 %468, %v56
    %v470 = vpop.permute.xlu0 %469
    %473 = vset.pattern.permute.xlu0 0
    %474 = vperm.xlu0 %473, %v57
    %v475 = vpop.permute.xlu0 %474
    %v477 = vmul.f32 %v441, %v450
    %v478 = vmul.f32 %v442, %v455
    %v479 = vmul.f32 %v443, %v460
    %v480 = vmul.f32 %v444, %v465
    %v481 = vmul.f32 %v445, %v470
    %v482 = vmul.f32 %v446, %v475
    %v483 = vld [vmem:[%s2] sm:$0xff]
    %v484 = vld [vmem:[%s2 + $0x8] sm:$0xff]
    %v485 = vld [vmem:[%s2 + $0x10] sm:$0xff]
    %v486 = vld [vmem:[%s2 + $0x18] sm:$0xff]
    %v487 = vld [vmem:[%s2 + $0x20] sm:$0xff]
    %v488 = vld [vmem:[%s2 + $0x28] sm:$0xff]
    %v489 = vld [vmem:[%s2 + $0x30] sm:$0xff]
    %v490 = vld [vmem:[%s2 + $0x38] sm:$0xff]
    %v491 = vld [vmem:[%s2 + $0x40] sm:$0xff]
    %v492 = vld [vmem:[%s2 + $0x48] sm:$0xff]
    %v493 = vld [vmem:[%s2 + $0x50] sm:$0xff]
    %v494 = vld [vmem:[%s2 + $0x58] sm:$0xff]
    %v495 = vld [vmem:[%s2 + $0x60] sm:$0xff]
    %v496 = vld [vmem:[%s2 + $0x68] sm:$0xff]
    %v497 = vld [vmem:[%s2 + $0x70] sm:$0xff]
    %v498 = vld [vmem:[%s2 + $0x78] sm:$0xff]
    %499 = vmatprep.subr.mxu0 0.0
    %500 = vmatpush1.msra.mxu0 %v498
    %501 = vmatprep.subr.mxu0 0.0
    %502 = vmatpush1.msra.mxu0 %v497
    %503 = vmatprep.subr.mxu0 0.0
    %504 = vmatpush1.msra.mxu0 %v496
    %505 = vmatprep.subr.mxu0 0.0
    %506 = vmatpush1.msra.mxu0 %v495
    %507 = vmatprep.subr.mxu0 0.0
    %508 = vmatpush1.msra.mxu0 %v494
    %509 = vmatprep.subr.mxu0 0.0
    %510 = vmatpush1.msra.mxu0 %v493
    %511 = vmatprep.subr.mxu0 0.0
    %512 = vmatpush1.msra.mxu0 %v492
    %513 = vmatprep.subr.mxu0 0.0
    %514 = vmatpush1.msra.mxu0 %v491
    %515 = vmatprep.subr.mxu0 0.0
    %516 = vmatpush1.msra.mxu0 %v490
    %517 = vmatprep.subr.mxu0 0.0
    %518 = vmatpush1.msra.mxu0 %v489
    %519 = vmatprep.subr.mxu0 0.0
    %520 = vmatpush1.msra.mxu0 %v488
    %521 = vmatprep.subr.mxu0 0.0
    %522 = vmatpush1.msra.mxu0 %v487
    %523 = vmatprep.subr.mxu0 0.0
    %524 = vmatpush1.msra.mxu0 %v486
    %525 = vmatprep.subr.mxu0 0.0
    %526 = vmatpush1.msra.mxu0 %v485
    %527 = vmatprep.subr.mxu0 0.0
    %528 = vmatpush1.msra.mxu0 %v484
    %529 = vmatprep.subr.mxu0 0.0
    %530 = vmatpush1.msra.mxu0 %v483
    %531 = vmatprep.subr.mxu0 0.0
    %532 = vmatpush2.msra.mxu0 0.0
    %533 = vmatprep.subr.mxu0 0.0
    %534 = vmatpush2.msra.mxu0 0.0
    %535 = vmatprep.subr.mxu0 0.0
    %536 = vmatpush2.msra.mxu0 0.0
    %537 = vmatprep.subr.mxu0 0.0
    %538 = vmatpush2.msra.mxu0 0.0
    %539 = vmatprep.subr.mxu0 0.0
    %540 = vmatpush2.msra.mxu0 0.0
    %541 = vmatprep.subr.mxu0 0.0
    %542 = vmatpush2.msra.mxu0 0.0
    %543 = vmatprep.subr.mxu0 0.0
    %544 = vmatpush2.msra.mxu0 0.0
    %545 = vmatprep.subr.mxu0 0.0
    %546 = vmatpush2.msra.mxu0 0.0
    %547 = vmatprep.subr.mxu0 0.0
    %548 = vmatpush2.msra.mxu0 0.0
    %549 = vmatprep.subr.mxu0 0.0
    %550 = vmatpush2.msra.mxu0 0.0
    %551 = vmatprep.subr.mxu0 0.0
    %552 = vmatpush2.msra.mxu0 0.0
    %553 = vmatprep.subr.mxu0 0.0
    %554 = vmatpush2.msra.mxu0 0.0
    %555 = vmatprep.subr.mxu0 0.0
    %556 = vmatpush2.msra.mxu0 0.0
    %557 = vmatprep.subr.mxu0 0.0
    %558 = vmatpush2.msra.mxu0 0.0
    %559 = vmatprep.subr.mxu0 0.0
    %560 = vmatpush2.msra.mxu0 0.0
    %561 = vmatprep.subr.mxu0 0.0
    %562 = vmatpush2.msra.mxu0 0.0
    %563 = vmatprep.mubr.f32.mxu0 0.0
    %564 = vmatmul.mubr.f32.gmra.mxu0 %v477
    %v565 = vpop.f32.mrf.mxu0
    %v566 = vadd.f32 0.0, %v565
    %v567 = vpop.f32.mrf.mxu0
    %568 = vmatprep.mubr.f32.mxu0 0.0
    %569 = vmatmul.mubr.f32.gmra.mxu0 %v478
    %v570 = vpop.f32.mrf.mxu0
    %v571 = vadd.f32 0.0, %v570
    %v572 = vpop.f32.mrf.mxu0
    %573 = vmatprep.mubr.f32.mxu0 0.0
    %574 = vmatmul.mubr.f32.gmra.mxu0 %v479
    %v575 = vpop.f32.mrf.mxu0
    %v576 = vadd.f32 0.0, %v575
    %v577 = vpop.f32.mrf.mxu0
    %578 = vmatprep.mubr.f32.mxu0 0.0
    %579 = vmatmul.mubr.f32.gmra.mxu0 %v480
    %v580 = vpop.f32.mrf.mxu0
    %v581 = vadd.f32 0.0, %v580
    %v582 = vpop.f32.mrf.mxu0
    %583 = vmatprep.mubr.f32.mxu0 0.0
    %584 = vmatmul.mubr.f32.gmra.mxu0 %v481
    %v585 = vpop.f32.mrf.mxu0
    %v586 = vadd.f32 0.0, %v585
    %v587 = vpop.f32.mrf.mxu0
    %588 = vmatprep.mubr.f32.mxu0 0.0
    %589 = vmatmul.mubr.f32.gmra.mxu0 %v482
    %v590 = vpop.f32.mrf.mxu0
    %v591 = vadd.f32 0.0, %v590
    %v592 = vpop.f32.mrf.mxu0
    %593 = vdwg.mxu0
    %s594 = scalar_lea.vmem %s2, 128
    %v595 = vld [vmem:[%s594] sm:$0xff]
    %v596 = vld [vmem:[%s594 + $0x8] sm:$0xff]
    %v597 = vld [vmem:[%s594 + $0x10] sm:$0xff]
    %v598 = vld [vmem:[%s594 + $0x18] sm:$0xff]
    %v599 = vld [vmem:[%s594 + $0x20] sm:$0xff]
    %v600 = vld [vmem:[%s594 + $0x28] sm:$0xff]
    %v601 = vld [vmem:[%s594 + $0x30] sm:$0xff]
    %v602 = vld [vmem:[%s594 + $0x38] sm:$0xff]
    %v603 = vld [vmem:[%s594 + $0x40] sm:$0xff]
    %v604 = vld [vmem:[%s594 + $0x48] sm:$0xff]
    %v605 = vld [vmem:[%s594 + $0x50] sm:$0xff]
    %v606 = vld [vmem:[%s594 + $0x58] sm:$0xff]
    %v607 = vld [vmem:[%s594 + $0x60] sm:$0xff]
    %v608 = vld [vmem:[%s594 + $0x68] sm:$0xff]
    %v609 = vld [vmem:[%s594 + $0x70] sm:$0xff]
    %v610 = vld [vmem:[%s594 + $0x78] sm:$0xff]
    %611 = vmatprep.subr.mxu0 0.0
    %612 = vmatpush1.msra.mxu0 %v610
    %613 = vmatprep.subr.mxu0 0.0
    %614 = vmatpush1.msra.mxu0 %v609
    %615 = vmatprep.subr.mxu0 0.0
    %616 = vmatpush1.msra.mxu0 %v608
    %617 = vmatprep.subr.mxu0 0.0
    %618 = vmatpush1.msra.mxu0 %v607
    %619 = vmatprep.subr.mxu0 0.0
    %620 = vmatpush1.msra.mxu0 %v606
    %621 = vmatprep.subr.mxu0 0.0
    %622 = vmatpush1.msra.mxu0 %v605
    %623 = vmatprep.subr.mxu0 0.0
    %624 = vmatpush1.msra.mxu0 %v604
    %625 = vmatprep.subr.mxu0 0.0
    %626 = vmatpush1.msra.mxu0 %v603
    %627 = vmatprep.subr.mxu0 0.0
    %628 = vmatpush1.msra.mxu0 %v602
    %629 = vmatprep.subr.mxu0 0.0
    %630 = vmatpush1.msra.mxu0 %v601
    %631 = vmatprep.subr.mxu0 0.0
    %632 = vmatpush1.msra.mxu0 %v600
    %633 = vmatprep.subr.mxu0 0.0
    %634 = vmatpush1.msra.mxu0 %v599
    %635 = vmatprep.subr.mxu0 0.0
    %636 = vmatpush1.msra.mxu0 %v598
    %637 = vmatprep.subr.mxu0 0.0
    %638 = vmatpush1.msra.mxu0 %v597
    %639 = vmatprep.subr.mxu0 0.0
    %640 = vmatpush1.msra.mxu0 %v596
    %641 = vmatprep.subr.mxu0 0.0
    %642 = vmatpush1.msra.mxu0 %v595
    %643 = vmatprep.subr.mxu0 0.0
    %644 = vmatpush2.msra.mxu0 0.0
    %645 = vmatprep.subr.mxu0 0.0
    %646 = vmatpush2.msra.mxu0 0.0
    %647 = vmatprep.subr.mxu0 0.0
    %648 = vmatpush2.msra.mxu0 0.0
    %649 = vmatprep.subr.mxu0 0.0
    %650 = vmatpush2.msra.mxu0 0.0
    %651 = vmatprep.subr.mxu0 0.0
    %652 = vmatpush2.msra.mxu0 0.0
    %653 = vmatprep.subr.mxu0 0.0
    %654 = vmatpush2.msra.mxu0 0.0
    %655 = vmatprep.subr.mxu0 0.0
    %656 = vmatpush2.msra.mxu0 0.0
    %657 = vmatprep.subr.mxu0 0.0
    %658 = vmatpush2.msra.mxu0 0.0
    %659 = vmatprep.subr.mxu0 0.0
    %660 = vmatpush2.msra.mxu0 0.0
    %661 = vmatprep.subr.mxu0 0.0
    %662 = vmatpush2.msra.mxu0 0.0
    %663 = vmatprep.subr.mxu0 0.0
    %664 = vmatpush2.msra.mxu0 0.0
    %665 = vmatprep.subr.mxu0 0.0
    %666 = vmatpush2.msra.mxu0 0.0
    %667 = vmatprep.subr.mxu0 0.0
    %668 = vmatpush2.msra.mxu0 0.0
    %669 = vmatprep.subr.mxu0 0.0
    %670 = vmatpush2.msra.mxu0 0.0
    %671 = vmatprep.subr.mxu0 0.0
    %672 = vmatpush2.msra.mxu0 0.0
    %673 = vmatprep.subr.mxu0 0.0
    %674 = vmatpush2.msra.mxu0 0.0
    %675 = vmatprep.mubr.f32.mxu0 0.0
    %676 = vmatmul.mubr.f32.gmra.mxu0 %v477
    %v677 = vpop.f32.mrf.mxu0
    %v678 = vadd.f32 0.0, %v677
    %v679 = vpop.f32.mrf.mxu0
    %680 = vmatprep.mubr.f32.mxu0 0.0
    %681 = vmatmul.mubr.f32.gmra.mxu0 %v478
    %v682 = vpop.f32.mrf.mxu0
    %v683 = vadd.f32 0.0, %v682
    %v684 = vpop.f32.mrf.mxu0
    %685 = vmatprep.mubr.f32.mxu0 0.0
    %686 = vmatmul.mubr.f32.gmra.mxu0 %v479
    %v687 = vpop.f32.mrf.mxu0
    %v688 = vadd.f32 0.0, %v687
    %v689 = vpop.f32.mrf.mxu0
    %690 = vmatprep.mubr.f32.mxu0 0.0
    %691 = vmatmul.mubr.f32.gmra.mxu0 %v480
    %v692 = vpop.f32.mrf.mxu0
    %v693 = vadd.f32 0.0, %v692
    %v694 = vpop.f32.mrf.mxu0
    %695 = vmatprep.mubr.f32.mxu0 0.0
    %696 = vmatmul.mubr.f32.gmra.mxu0 %v481
    %v697 = vpop.f32.mrf.mxu0
    %v698 = vadd.f32 0.0, %v697
    %v699 = vpop.f32.mrf.mxu0
    %700 = vmatprep.mubr.f32.mxu0 0.0
    %701 = vmatmul.mubr.f32.gmra.mxu0 %v482
    %v702 = vpop.f32.mrf.mxu0
    %v703 = vadd.f32 0.0, %v702
    %v704 = vpop.f32.mrf.mxu0
    %705 = vdwg.mxu0
    %s706 = scalar_lea.vmem %s2, 256
    %v707 = vld [vmem:[%s706] sm:$0xff]
    %v708 = vld [vmem:[%s706 + $0x8] sm:$0xff]
    %v709 = vld [vmem:[%s706 + $0x10] sm:$0xff]
    %v710 = vld [vmem:[%s706 + $0x18] sm:$0xff]
    %v711 = vld [vmem:[%s706 + $0x20] sm:$0xff]
    %v712 = vld [vmem:[%s706 + $0x28] sm:$0xff]
    %v713 = vld [vmem:[%s706 + $0x30] sm:$0xff]
    %v714 = vld [vmem:[%s706 + $0x38] sm:$0xff]
    %v715 = vld [vmem:[%s706 + $0x40] sm:$0xff]
    %v716 = vld [vmem:[%s706 + $0x48] sm:$0xff]
    %v717 = vld [vmem:[%s706 + $0x50] sm:$0xff]
    %v718 = vld [vmem:[%s706 + $0x58] sm:$0xff]
    %v719 = vld [vmem:[%s706 + $0x60] sm:$0xff]
    %v720 = vld [vmem:[%s706 + $0x68] sm:$0xff]
    %v721 = vld [vmem:[%s706 + $0x70] sm:$0xff]
    %v722 = vld [vmem:[%s706 + $0x78] sm:$0xff]
    %723 = vmatprep.subr.mxu0 0.0
    %724 = vmatpush1.msra.mxu0 %v722
    %725 = vmatprep.subr.mxu0 0.0
    %726 = vmatpush1.msra.mxu0 %v721
    %727 = vmatprep.subr.mxu0 0.0
    %728 = vmatpush1.msra.mxu0 %v720
    %729 = vmatprep.subr.mxu0 0.0
    %730 = vmatpush1.msra.mxu0 %v719
    %731 = vmatprep.subr.mxu0 0.0
    %732 = vmatpush1.msra.mxu0 %v718
    %733 = vmatprep.subr.mxu0 0.0
    %734 = vmatpush1.msra.mxu0 %v717
    %735 = vmatprep.subr.mxu0 0.0
    %736 = vmatpush1.msra.mxu0 %v716
    %737 = vmatprep.subr.mxu0 0.0
    %738 = vmatpush1.msra.mxu0 %v715
    %739 = vmatprep.subr.mxu0 0.0
    %740 = vmatpush1.msra.mxu0 %v714
    %741 = vmatprep.subr.mxu0 0.0
    %742 = vmatpush1.msra.mxu0 %v713
    %743 = vmatprep.subr.mxu0 0.0
    %744 = vmatpush1.msra.mxu0 %v712
    %745 = vmatprep.subr.mxu0 0.0
    %746 = vmatpush1.msra.mxu0 %v711
    %747 = vmatprep.subr.mxu0 0.0
    %748 = vmatpush1.msra.mxu0 %v710
    %749 = vmatprep.subr.mxu0 0.0
    %750 = vmatpush1.msra.mxu0 %v709
    %751 = vmatprep.subr.mxu0 0.0
    %752 = vmatpush1.msra.mxu0 %v708
    %753 = vmatprep.subr.mxu0 0.0
    %754 = vmatpush1.msra.mxu0 %v707
    %755 = vmatprep.subr.mxu0 0.0
    %756 = vmatpush2.msra.mxu0 0.0
    %757 = vmatprep.subr.mxu0 0.0
    %758 = vmatpush2.msra.mxu0 0.0
    %759 = vmatprep.subr.mxu0 0.0
    %760 = vmatpush2.msra.mxu0 0.0
    %761 = vmatprep.subr.mxu0 0.0
    %762 = vmatpush2.msra.mxu0 0.0
    %763 = vmatprep.subr.mxu0 0.0
    %764 = vmatpush2.msra.mxu0 0.0
    %765 = vmatprep.subr.mxu0 0.0
    %766 = vmatpush2.msra.mxu0 0.0
    %767 = vmatprep.subr.mxu0 0.0
    %768 = vmatpush2.msra.mxu0 0.0
    %769 = vmatprep.subr.mxu0 0.0
    %770 = vmatpush2.msra.mxu0 0.0
    %771 = vmatprep.subr.mxu0 0.0
    %772 = vmatpush2.msra.mxu0 0.0
    %773 = vmatprep.subr.mxu0 0.0
    %774 = vmatpush2.msra.mxu0 0.0
    %775 = vmatprep.subr.mxu0 0.0
    %776 = vmatpush2.msra.mxu0 0.0
    %777 = vmatprep.subr.mxu0 0.0
    %778 = vmatpush2.msra.mxu0 0.0
    %779 = vmatprep.subr.mxu0 0.0
    %780 = vmatpush2.msra.mxu0 0.0
    %781 = vmatprep.subr.mxu0 0.0
    %782 = vmatpush2.msra.mxu0 0.0
    %783 = vmatprep.subr.mxu0 0.0
    %784 = vmatpush2.msra.mxu0 0.0
    %785 = vmatprep.subr.mxu0 0.0
    %786 = vmatpush2.msra.mxu0 0.0
    %787 = vmatprep.mubr.f32.mxu0 0.0
    %788 = vmatmul.mubr.f32.gmra.mxu0 %v477
    %v789 = vpop.f32.mrf.mxu0
    %v790 = vadd.f32 0.0, %v789
    %v791 = vpop.f32.mrf.mxu0
    %792 = vmatprep.mubr.f32.mxu0 0.0
    %793 = vmatmul.mubr.f32.gmra.mxu0 %v478
    %v794 = vpop.f32.mrf.mxu0
    %v795 = vadd.f32 0.0, %v794
    %v796 = vpop.f32.mrf.mxu0
    %797 = vmatprep.mubr.f32.mxu0 0.0
    %798 = vmatmul.mubr.f32.gmra.mxu0 %v479
    %v799 = vpop.f32.mrf.mxu0
    %v800 = vadd.f32 0.0, %v799
    %v801 = vpop.f32.mrf.mxu0
    %802 = vmatprep.mubr.f32.mxu0 0.0
    %803 = vmatmul.mubr.f32.gmra.mxu0 %v480
    %v804 = vpop.f32.mrf.mxu0
    %v805 = vadd.f32 0.0, %v804
    %v806 = vpop.f32.mrf.mxu0
    %807 = vmatprep.mubr.f32.mxu0 0.0
    %808 = vmatmul.mubr.f32.gmra.mxu0 %v481
    %v809 = vpop.f32.mrf.mxu0
    %v810 = vadd.f32 0.0, %v809
    %v811 = vpop.f32.mrf.mxu0
    %812 = vmatprep.mubr.f32.mxu0 0.0
    %813 = vmatmul.mubr.f32.gmra.mxu0 %v482
    %v814 = vpop.f32.mrf.mxu0
    %v815 = vadd.f32 0.0, %v814
    %v816 = vpop.f32.mrf.mxu0
    %817 = vdwg.mxu0
    %v818 = vrot.slane %v566, 7
    %v819 = vrot.slane %v571, 7
    %v820 = vrot.slane %v576, 7
    %v821 = vrot.slane %v581, 7
    %v822 = vrot.slane %v586, 7
    %v823 = vrot.slane %v591, 7
    %v824 = vsel %vm396, %v822, %v823
    %v825 = vsel %vm396, %v821, %v822
    %v826 = vsel %vm396, %v820, %v821
    %v827 = vsel %vm396, %v819, %v820
    %v828 = vsel %vm396, %v818, %v819
    %v829 = vsel %vm396, %v823, %v818
    %v830 = vadd.f32 %v829, %v678
    %v831 = vadd.f32 %v828, %v683
    %v832 = vadd.f32 %v827, %v688
    %v833 = vadd.f32 %v826, %v693
    %v834 = vadd.f32 %v825, %v698
    %v835 = vadd.f32 %v824, %v703
    %v836 = vrot.slane %v790, 1
    %v837 = vrot.slane %v795, 1
    %v838 = vrot.slane %v800, 1
    %v839 = vrot.slane %v805, 1
    %v840 = vrot.slane %v810, 1
    %v841 = vrot.slane %v815, 1
    %v842 = vsel %vm415, %v840, %v841
    %v843 = vsel %vm415, %v839, %v840
    %v844 = vsel %vm415, %v838, %v839
    %v845 = vsel %vm415, %v837, %v838
    %v846 = vsel %vm415, %v836, %v837
    %v847 = vsel %vm415, %v841, %v836
    %v848 = vadd.f32 %v830, %v846
    %v849 = vadd.f32 %v831, %v845
    %v850 = vadd.f32 %v832, %v844
    %v851 = vadd.f32 %v833, %v843
    %v852 = vadd.f32 %v834, %v842
    %v853 = vadd.f32 %v835, %v847
    %v854 = vld [vmem:[%s5] sm:$0x1]
    %v856 = vlaneseq
    %v857 = vshrl.u32 %v856, 7
    %v858 = vsub.s32 0, %v857
    %v859 = vrot.slane %v854, %v858
    %v861 = vadd.f32 %v848, %v859
    %v862 = vadd.f32 %v849, %v859
    %v863 = vadd.f32 %v850, %v859
    %v864 = vadd.f32 %v851, %v859
    %v865 = vadd.f32 %v852, %v859
    %v866 = vadd.f32 %v853, %v859
    %v867 = vmax.f32 %v861, 0.0
    %v868 = vmax.f32 %v862, 0.0
    %v869 = vmax.f32 %v863, 0.0
    %v870 = vmax.f32 %v864, 0.0
    %v871 = vmax.f32 %v865, 0.0
    %v872 = vmax.f32 %v866, 0.0
    %v873 = vld [vmem:[%s3] sm:$0xff]
    %v874 = vld [vmem:[%s3 + $0x8] sm:$0xff]
    %v875 = vld [vmem:[%s3 + $0x10] sm:$0xff]
    %v876 = vld [vmem:[%s3 + $0x18] sm:$0xff]
    %v877 = vld [vmem:[%s3 + $0x20] sm:$0xff]
    %v878 = vld [vmem:[%s3 + $0x28] sm:$0xff]
    %v879 = vld [vmem:[%s3 + $0x30] sm:$0xff]
    %v880 = vld [vmem:[%s3 + $0x38] sm:$0xff]
    %881 = vmatprep.subr.mxu0 0.0
    %882 = vmatpush1.msra.mxu0 0.0
    %883 = vmatprep.subr.mxu0 0.0
    %884 = vmatpush1.msra.mxu0 0.0
    %885 = vmatprep.subr.mxu0 0.0
    %886 = vmatpush1.msra.mxu0 0.0
    %887 = vmatprep.subr.mxu0 0.0
    %888 = vmatpush1.msra.mxu0 0.0
    %889 = vmatprep.subr.mxu0 0.0
    %890 = vmatpush1.msra.mxu0 0.0
    %891 = vmatprep.subr.mxu0 0.0
    %892 = vmatpush1.msra.mxu0 0.0
    %893 = vmatprep.subr.mxu0 0.0
    %894 = vmatpush1.msra.mxu0 0.0
    %895 = vmatprep.subr.mxu0 0.0
    %896 = vmatpush1.msra.mxu0 0.0
    %897 = vmatprep.subr.mxu0 0.0
    %898 = vmatpush1.msra.mxu0 %v880
    %899 = vmatprep.subr.mxu0 0.0
    %900 = vmatpush1.msra.mxu0 %v879
    %901 = vmatprep.subr.mxu0 0.0
    %902 = vmatpush1.msra.mxu0 %v878
    %903 = vmatprep.subr.mxu0 0.0
    %904 = vmatpush1.msra.mxu0 %v877
    %905 = vmatprep.subr.mxu0 0.0
    %906 = vmatpush1.msra.mxu0 %v876
    %907 = vmatprep.subr.mxu0 0.0
    %908 = vmatpush1.msra.mxu0 %v875
    %909 = vmatprep.subr.mxu0 0.0
    %910 = vmatpush1.msra.mxu0 %v874
    %911 = vmatprep.subr.mxu0 0.0
    %912 = vmatpush1.msra.mxu0 %v873
    %913 = vmatprep.subr.mxu0 0.0
    %914 = vmatpush2.msra.mxu0 0.0
    %915 = vmatprep.subr.mxu0 0.0
    %916 = vmatpush2.msra.mxu0 0.0
    %917 = vmatprep.subr.mxu0 0.0
    %918 = vmatpush2.msra.mxu0 0.0
    %919 = vmatprep.subr.mxu0 0.0
    %920 = vmatpush2.msra.mxu0 0.0
    %921 = vmatprep.subr.mxu0 0.0
    %922 = vmatpush2.msra.mxu0 0.0
    %923 = vmatprep.subr.mxu0 0.0
    %924 = vmatpush2.msra.mxu0 0.0
    %925 = vmatprep.subr.mxu0 0.0
    %926 = vmatpush2.msra.mxu0 0.0
    %927 = vmatprep.subr.mxu0 0.0
    %928 = vmatpush2.msra.mxu0 0.0
    %929 = vmatprep.subr.mxu0 0.0
    %930 = vmatpush2.msra.mxu0 0.0
    %931 = vmatprep.subr.mxu0 0.0
    %932 = vmatpush2.msra.mxu0 0.0
    %933 = vmatprep.subr.mxu0 0.0
    %934 = vmatpush2.msra.mxu0 0.0
    %935 = vmatprep.subr.mxu0 0.0
    %936 = vmatpush2.msra.mxu0 0.0
    %937 = vmatprep.subr.mxu0 0.0
    %938 = vmatpush2.msra.mxu0 0.0
    %939 = vmatprep.subr.mxu0 0.0
    %940 = vmatpush2.msra.mxu0 0.0
    %941 = vmatprep.subr.mxu0 0.0
    %942 = vmatpush2.msra.mxu0 0.0
    %943 = vmatprep.subr.mxu0 0.0
    %944 = vmatpush2.msra.mxu0 0.0
    %945 = vmatprep.mubr.f32.mxu0 0.0
    %946 = vmatmul.mubr.f32.gmra.mxu0 %v68
    %v947 = vpop.f32.mrf.mxu0
    %v948 = vadd.f32 %v867, %v947
    %v949 = vpop.f32.mrf.mxu0
    %950 = vmatprep.mubr.f32.mxu0 0.0
    %951 = vmatmul.mubr.f32.gmra.mxu0 %v71
    %v952 = vpop.f32.mrf.mxu0
    %v953 = vadd.f32 %v868, %v952
    %v954 = vpop.f32.mrf.mxu0
    %955 = vmatprep.mubr.f32.mxu0 0.0
    %956 = vmatmul.mubr.f32.gmra.mxu0 %v74
    %v957 = vpop.f32.mrf.mxu0
    %v958 = vadd.f32 %v869, %v957
    %v959 = vpop.f32.mrf.mxu0
    %960 = vmatprep.mubr.f32.mxu0 0.0
    %961 = vmatmul.mubr.f32.gmra.mxu0 %v77
    %v962 = vpop.f32.mrf.mxu0
    %v963 = vadd.f32 %v870, %v962
    %v964 = vpop.f32.mrf.mxu0
    %965 = vmatprep.mubr.f32.mxu0 0.0
    %966 = vmatmul.mubr.f32.gmra.mxu0 %v80
    %v967 = vpop.f32.mrf.mxu0
    %v968 = vadd.f32 %v871, %v967
    %v969 = vpop.f32.mrf.mxu0
    %970 = vmatprep.mubr.f32.mxu0 0.0
    %971 = vmatmul.mubr.f32.gmra.mxu0 %v83
    %v972 = vpop.f32.mrf.mxu0
    %v973 = vadd.f32 %v872, %v972
    %v974 = vpop.f32.mrf.mxu0
    %975 = vdwg.mxu0
    %v976 = vld [vmem:[%s6] sm:$0x1]
    %v978 = vlaneseq
    %v979 = vshrl.u32 %v978, 7
    %v980 = vsub.s32 0, %v979
    %v981 = vrot.slane %v976, %v980
    %v983 = vmul.f32 %v948, %v981
    %v984 = vmul.f32 %v953, %v981
    %v985 = vmul.f32 %v958, %v981
    %v986 = vmul.f32 %v963, %v981
    %v987 = vmul.f32 %v968, %v981
    %v988 = vmul.f32 %v973, %v981
    %v989 = vld [vmem:[%s7] sm:$0x1]
    %v991 = vlaneseq
    %v992 = vshrl.u32 %v991, 7
    %v993 = vsub.s32 0, %v992
    %v994 = vrot.slane %v989, %v993
    %v996 = vadd.f32 %v983, %v994
    %v997 = vadd.f32 %v984, %v994
    %v998 = vadd.f32 %v985, %v994
    %v999 = vadd.f32 %v986, %v994
    %v1000 = vadd.f32 %v987, %v994
    %v1001 = vadd.f32 %v988, %v994
    %1002 = vst [vmem:[%s9] sm:$0xff] %v996
    %1003 = vst [vmem:[%s9 + $0x8] sm:$0xff] %v997
    %1004 = vst [vmem:[%s9 + $0x10] sm:$0xff] %v998
    %1005 = vst [vmem:[%s9 + $0x18] sm:$0xff] %v999
    %1006 = vst [vmem:[%s9 + $0x20] sm:$0xff] %v1000
    %1007 = vst [vmem:[%s9 + $0x28] sm:$0xff] %v1001
    // Predicated region
    $region42: #{encoder_block_pallas.1} parent=1 // pred_check
      _
    $region43: #{encoder_block_pallas.1} parent=1 // pred_check_branch
      %1009 = sbr.rel (0) target = $region45
    $region44: #{encoder_block_pallas.1} parent=1 // pred_region
      _
    $region45: #{encoder_block_pallas.1} parent=1 // pred_fallthru
      _
    // Predicated region
    $region46: #{encoder_block_pallas.1} parent=1 // pred_check
      _
    $region47: #{encoder_block_pallas.1} parent=1 // pred_check_branch
      %1011 = sbr.rel (0) target = $region49
    $region48: #{encoder_block_pallas.1} parent=1 // pred_region
      _
    $region49: #{encoder_block_pallas.1} parent=1 // pred_fallthru
      _
    %1012 = vsyncpa [#allocation3], 1

</llo_original>
